<compile_context>
chip_gen: v6e
topology: v6e:2x2x1
jax: 0.10.0
libtpu: 0.0.40
codegen_flags: <defaults>
</compile_context>

<pallas_src>
import math
from functools import partial

import jax
import jax.numpy as jnp
from jax.experimental import pallas as pl
from jax.experimental.pallas import tpu as pltpu


# ----------------------------------------------------------------------------
# small helpers
# ----------------------------------------------------------------------------
def _round_up(n, m):
    return ((n + m - 1) // m) * m


def _pad_rows(a, n_pad):
    return jnp.pad(a, ((0, n_pad - a.shape[0]), (0, 0)))


def _pick_tile(n_pad, cap=512):
    """Largest power-of-two row tile <= cap that divides n_pad (n_pad is a multiple of 128)."""
    t = 128
    while t * 2 <= min(cap, n_pad) and n_pad % (t * 2) == 0:
        t *= 2
    return t


def _bf16_elementwise_ok():
    """bf16 VPU exists on v6e/v7x; keep elementwise math in f32 on older chips (perf only)."""
    try:
        kind = jax.devices()[0].device_kind.lower()
    except Exception:
        return True
    for tag in ("v2", "v3", "v4", "v5 lite", "v5lite", "v5e"):
        if tag in kind:
            return False
    return True


# ----------------------------------------------------------------------------
# Hoisted projection kernel:  src = pos@W1p + b1 (+ x@W1x),  tgt = pos@W1p
#   (stored in `proj_dtype`, bf16 on v6e/v7x, so the hot loop reloads half the bytes)
# ----------------------------------------------------------------------------
def _make_proj_kernel(has_x, out_dtype):
    def kernel(*refs):
        if has_x:
            x_ref, pos_ref, w1x_ref, w1p_ref, b1_ref, src_ref, tgt_ref = refs
        else:
            pos_ref, w1p_ref, b1_ref, src_ref, tgt_ref = refs
        t = jnp.dot(pos_ref[...], w1p_ref[...], preferred_element_type=jnp.float32)
        tgt_ref[...] = t.astype(out_dtype)
        s = t + b1_ref[...]
        if has_x:
            s = s + jnp.dot(x_ref[...], w1x_ref[...],
                            preferred_element_type=jnp.float32)
        src_ref[...] = s.astype(out_dtype)
    return kernel


def _project(x, pos, w1x, w1p, b1, out_dtype):
    n_pad = pos.shape[0]
    h = w1p.shape[1]
    tp = _pick_tile(n_pad)
    has_x = x is not None
    if has_x:
        fin = x.shape[1]
        in_specs = [pl.BlockSpec((tp, fin), lambda i: (i, 0)),
                    pl.BlockSpec((tp, 3), lambda i: (i, 0)),
                    pl.BlockSpec((fin, h), lambda i: (0, 0)),
                    pl.BlockSpec((3, h), lambda i: (0, 0)),
                    pl.BlockSpec((1, h), lambda i: (0, 0))]
        args = (x, pos, w1x, w1p, b1)
    else:
        in_specs = [pl.BlockSpec((tp, 3), lambda i: (i, 0)),
                    pl.BlockSpec((3, h), lambda i: (0, 0)),
                    pl.BlockSpec((1, h), lambda i: (0, 0))]
        args = (pos, w1p, b1)

    return pl.pallas_call(
        _make_proj_kernel(has_x, out_dtype),
        out_shape=(jax.ShapeDtypeStruct((n_pad, h), out_dtype),
                   jax.ShapeDtypeStruct((n_pad, h), out_dtype)),
        grid=(n_pad // tp,),
        in_specs=in_specs,
        out_specs=(pl.BlockSpec((tp, h), lambda i: (i, 0)),
                   pl.BlockSpec((tp, h), lambda i: (i, 0))),
        compiler_params=pltpu.CompilerParams(
            dimension_semantics=("parallel",)),
    )(*args)


# ----------------------------------------------------------------------------
# PointConv hot path: per-edge MLP + masked running-max aggregation.
#   grid = (target tiles [parallel], source tiles [arbitrary, last])
# ----------------------------------------------------------------------------
def _make_pointconv_kernel(r2):
    def kernel(srcp_ref, post_ref, bs_ref, tgtp_ref, pt_ref, bt_ref,
               w2_ref, b2_ref, o_ref, acc_ref):
        k = pl.program_id(1)

        @pl.when(k == 0)
        def _():
            acc_ref[...] = jnp.full(acc_ref.shape, -jnp.inf, acc_ref.dtype)

        # ---- adjacency on the VPU (radius graph, same graph, incl. self loops) ----
        # No K=3 MXU matmul here, so the MXU keeps W2 resident across the loop.
        pt = pt_ref[...]                                      # (TI, 3) f32
        ps = post_ref[...]                                    # (3, TS) f32
        dx = pt[:, 0:1] - ps[0:1, :]
        dy = pt[:, 1:2] - ps[1:2, :]
        dz = pt[:, 2:3] - ps[2:3, :]
        d2 = dx * dx + dy * dy + dz * dz                      # (TI, TS)
        adj = (d2 <= r2) & (bt_ref[...] == bs_ref[...])       # (TI, TS) bool

        # ---- skip tile pairs with no edges (cross-graph / out-of-radius) ----
        @pl.when(jnp.max(adj.astype(jnp.float32)) > 0.0)
        def _():
            # per-edge MLP: relu(src_j - tgt_i) @ W2   (bf16 matmul, f32 accumulation)
            src = srcp_ref[...]                               # (TS, H) proj_dtype
            tgt = tgtp_ref[...]                               # (TI, H) proj_dtype
            h = jnp.maximum(src[None, :, :] - tgt[:, None, :], 0.0)   # (TI, TS, H)
            ti_, ts_, hh = h.shape
            m = jnp.dot(h.reshape(ti_ * ts_, hh).astype(jnp.bfloat16), w2_ref[...],
                        preferred_element_type=jnp.float32)
            m = m.reshape(ti_, ts_, -1)                       # (TI, TS, Fo) f32

            # masked running max over this source tile
            m = jnp.where(adj[:, :, None], m, -jnp.inf)
            acc_ref[...] = jnp.maximum(acc_ref[...], jnp.max(m, axis=1))

        @pl.when(k == pl.num_programs(1) - 1)
        def _():
            # b2 folded here (max is shift-invariant) + fused trailing ReLU;
            # rows with no neighbour (acc == -inf) become 0.
            o_ref[...] = jnp.maximum(acc_ref[...] + b2_ref[...], 0.0)

    return kernel


def point_conv(x, pos, batch, r, w1x, w1p, b1, w2, b2, *, ti=64, ts=128):
    """x: (N, Fin) or None, pos: (N, 3), batch: (N,) int graph ids. Returns relu(PointConv)."""
    assert ts % 128 == 0 and ti % 16 == 0
    n = pos.shape[0]
    h = w1p.shape[1]
    fo = w2.shape[1]
    fo_pad = _round_up(max(fo, 128), 128)          # lane-dense output stores
    n_pad = _round_up(n, ts)

    proj_dtype = jnp.bfloat16 if _bf16_elementwise_ok() else jnp.float32

    pos_pad = _pad_rows(pos, n_pad)
    bi = batch.astype(jnp.int32)
    # padded sources get id -1, padded targets id -2 -> padded rows match nothing.
    bs_row = jnp.pad(bi, (0, n_pad - n), constant_values=-1).reshape(1, n_pad)
    bt_col = jnp.pad(bi, (0, n_pad - n), constant_values=-2).reshape(n_pad, 1)

    x_pad = _pad_rows(x, n_pad) if x is not None else None
    src_proj, tgt_proj = _project(x_pad, pos_pad, w1x, w1p, b1, proj_dtype)

    w2_pad = jnp.pad(w2, ((0, 0), (0, fo_pad - fo))).astype(jnp.bfloat16)
    b2_pad = jnp.pad(b2, ((0, 0), (0, fo_pad - fo)))           # f32, epilogue only

    grid = (n_pad // ti, n_pad // ts)
    out = pl.pallas_call(
        _make_pointconv_kernel(float(r) ** 2),
        out_shape=jax.ShapeDtypeStruct((n_pad, fo_pad), jnp.float32),
        grid=grid,
        in_specs=[
            pl.BlockSpec((ts, h), lambda i, k: (k, 0)),        # src projections (source tile)
            pl.BlockSpec((3, ts), lambda i, k: (0, k)),        # source positions (transposed)
            pl.BlockSpec((1, ts), lambda i, k: (0, k)),        # source graph ids (int32)
            pl.BlockSpec((ti, h), lambda i, k: (i, 0)),        # tgt projections (target tile)
            pl.BlockSpec((ti, 3), lambda i, k: (i, 0)),        # target positions
            pl.BlockSpec((ti, 1), lambda i, k: (i, 0)),        # target graph ids (int32)
            pl.BlockSpec((h, fo_pad), lambda i, k: (0, 0)),    # W2 (bf16)
            pl.BlockSpec((1, fo_pad), lambda i, k: (0, 0)),    # b2 (f32, epilogue)
        ],
        out_specs=pl.BlockSpec((ti, fo_pad), lambda i, k: (i, 0)),
        scratch_shapes=[pltpu.VMEM((ti, fo_pad), jnp.float32)],
        compiler_params=pltpu.CompilerParams(
            dimension_semantics=("parallel", "arbitrary"),
            vmem_limit_bytes=48 * 1024 * 1024),
    )(src_proj, pos_pad.T, bs_row, tgt_proj, pos_pad, bt_col, w2_pad, b2_pad)
    return out[:n, :fo]


# ----------------------------------------------------------------------------
# Head: tiled global_max_pool (running max, mask built in-kernel) +
#       lin1/relu + lin2/relu + lin3 + log_softmax.
# ----------------------------------------------------------------------------
def _make_head_kernel(num_graphs):
    def kernel(x_ref, bid_ref, w1_ref, b1_ref, w2_ref, b2_ref,
               w3_ref, b3_ref, o_ref, pool_ref):
        k = pl.program_id(0)

        @pl.when(k == 0)
        def _():
            pool_ref[...] = jnp.full(pool_ref.shape, -jnp.inf, pool_ref.dtype)

        x = x_ref[...]                                          # (TP, F)
        bid = bid_ref[...]                                      # (1, TP) int32
        gids = jax.lax.broadcasted_iota(jnp.int32, (num_graphs, bid.shape[1]), 0)
        mask = bid == gids                                      # (B, TP)
        vals = jnp.where(mask[:, :, None], x[None, :, :], -jnp.inf)
        pool_ref[...] = jnp.maximum(pool_ref[...], jnp.max(vals, axis=1))

        @pl.when(k == pl.num_programs(0) - 1)
        def _():
            pooled = pool_ref[...]
            pooled = jnp.where(pooled > -jnp.inf, pooled, 0.0)  # empty-graph guard
            h1 = jnp.maximum(jnp.dot(pooled, w1_ref[...],
                                     preferred_element_type=jnp.float32) + b1_ref[...], 0.0)
            h2 = jnp.maximum(jnp.dot(h1, w2_ref[...],
                                     preferred_element_type=jnp.float32) + b2_ref[...], 0.0)
            # TODO(synk): dropout(p=0.5) omitted (inference-mode identity).
            logits = jnp.dot(h2, w3_ref[...],
                             preferred_element_type=jnp.float32) + b3_ref[...]
            z = logits - jnp.max(logits, axis=-1, keepdims=True)
            o_ref[...] = z - jnp.log(jnp.sum(jnp.exp(z), axis=-1, keepdims=True))

    return kernel


def head(x, batch, num_graphs, w1, b1, w2, b2, w3, b3):
    n, f = x.shape
    n_pad = _round_up(n, 128)
    tp = _pick_tile(n_pad)
    x_pad = _pad_rows(x, n_pad)
    bid_row = jnp.pad(batch.astype(jnp.int32), (0, n_pad - n),
                      constant_values=-1).reshape(1, n_pad)
    c = w3.shape[1]
    return pl.pallas_call(
        _make_head_kernel(num_graphs),
        out_shape=jax.ShapeDtypeStruct((num_graphs, c), jnp.float32),
        grid=(n_pad // tp,),
        in_specs=[
            pl.BlockSpec((tp, f), lambda k: (k, 0)),
            pl.BlockSpec((1, tp), lambda k: (0, k)),
            pl.BlockSpec(w1.shape, lambda k: (0, 0)),
            pl.BlockSpec(b1.shape, lambda k: (0, 0)),
            pl.BlockSpec(w2.shape, lambda k: (0, 0)),
            pl.BlockSpec(b2.shape, lambda k: (0, 0)),
            pl.BlockSpec(w3.shape, lambda k: (0, 0)),
            pl.BlockSpec(b3.shape, lambda k: (0, 0)),
        ],
        out_specs=pl.BlockSpec((num_graphs, c), lambda k: (0, 0)),
        scratch_shapes=[pltpu.VMEM((num_graphs, f), jnp.float32)],
        compiler_params=pltpu.CompilerParams(
            dimension_semantics=("arbitrary",)),
    )(x_pad, bid_row, w1, b1, w2, b2, w3, b3)


# ----------------------------------------------------------------------------
# On-device farthest point sampling (deterministic start at node 0 of each graph).
# TODO(synk): torch_geometric fps uses random_start=True; deterministic start here.
# TODO(synk): torch_cluster radius_graph's max_num_neighbors=32 cap is not applied.
# ----------------------------------------------------------------------------
@partial(jax.jit, static_argnums=(1, 2, 3))
def fps_indices(pos, num_graphs, pts_per_graph, n_keep):
    p = pos.reshape(num_graphs, pts_per_graph, 3)

    def one(pg):
        d0 = jnp.sum((pg - pg[0]) ** 2, axis=-1)

        def step(d, _):
            nxt = jnp.argmax(d).astype(jnp.int32)
            d = jnp.minimum(d, jnp.sum((pg - pg[nxt]) ** 2, axis=-1))
            return d, nxt

        _, sel = jax.lax.scan(step, d0, None, length=n_keep - 1)
        return jnp.concatenate([jnp.zeros((1,), jnp.int32), sel])

    idx_local = jax.vmap(one)(p)                                   # (G, n_keep)
    offs = (jnp.arange(num_graphs, dtype=jnp.int32) * pts_per_graph)[:, None]
    return (idx_local + offs).reshape(-1)


def linear_params(key, fan_in, fan_out):
    kw, kb = jax.random.split(key)
    bound = 1.0 / math.sqrt(fan_in)
    w = jax.random.uniform(kw, (fan_in, fan_out), jnp.float32, -bound, bound)
    b = jax.random.uniform(kb, (1, fan_out), jnp.float32, -bound, bound)
    return w, b


# ----------------------------------------------------------------------------
# Full PointNet forward (mirrors the PyTorch module).
# ----------------------------------------------------------------------------
if __name__ == "__main__":
    num_classes = 10
    num_graphs = 2
    pts_per_graph = 32
    n_total = num_graphs * pts_per_graph

    key = jax.random.PRNGKey(0)
    keys = jax.random.split(key, 10)
    pos = jax.random.uniform(keys[0], (n_total, 3), jnp.float32)
    batch = jnp.repeat(jnp.arange(num_graphs, dtype=jnp.int32), pts_per_graph)

    # conv1 local_nn: Lin(3,64) -> ReLU -> Lin(64,64)
    wc1, bc1 = linear_params(keys[1], 3, 64)
    w2_1, b2_1 = linear_params(keys[2], 64, 64)
    # conv2 local_nn: Lin(67,128) -> ReLU -> Lin(128,128)   (concat order: x_j then pos_j-pos_i)
    wc2, bc2 = linear_params(keys[3], 67, 128)
    w2_2, b2_2 = linear_params(keys[4], 128, 128)
    # conv3 local_nn: Lin(131,256) -> ReLU -> Lin(256,256)
    wc3, bc3 = linear_params(keys[5], 131, 256)
    w2_3, b2_3 = linear_params(keys[6], 256, 256)
    # head
    wl1, bl1 = linear_params(keys[7], 256, 256)
    wl2, bl2 = linear_params(keys[8], 256, 256)
    wl3, bl3 = linear_params(keys[9], 256, num_classes)

    # ---- stage 1: radius 0.2, x = None (trailing ReLU fused into the kernel) ----
    x = point_conv(None, pos, batch, 0.2, None, wc1, bc1, w2_1, b2_1)

    keep1 = int(math.ceil(0.5 * pts_per_graph))
    idx = fps_indices(pos, num_graphs, pts_per_graph, keep1)
    x, pos1, batch1 = x[idx], pos[idx], batch[idx]

    # ---- stage 2: radius 0.4 ----
    x = point_conv(x, pos1, batch1, 0.4, wc2[:64], wc2[64:], bc2, w2_2, b2_2)

    keep2 = int(math.ceil(0.25 * keep1))
    idx = fps_indices(pos1, num_graphs, keep1, keep2)
    x, pos2, batch2 = x[idx], pos1[idx], batch1[idx]

    # ---- stage 3: radius 1.0 ----
    x = point_conv(x, pos2, batch2, 1.0, wc3[:128], wc3[128:], bc3, w2_3, b2_3)

    # ---- head: global max pool + MLP + log_softmax ----
    logp = head(x, batch2, num_graphs, wl1, bl1, wl2, bl2, wl3, bl3)
    jax.block_until_ready(logp)

    assert logp.shape == (num_graphs, num_classes)
    probs_sum = jnp.sum(jnp.exp(logp), axis=-1)
    assert bool(jnp.all(jnp.isfinite(logp)))
    assert bool(jnp.all(jnp.abs(probs_sum - 1.0) < 1e-3))
    print("KERNEL_OK")
</pallas_src>

<mosaic_0001>
module attributes {stable_mosaic.version = 11 : i64} {
  func.func @kernel(%arg0: i32, %arg1: memref<128x3xf32, #tpu.memory_space<vmem>>, %arg2: memref<3x64xf32, #tpu.memory_space<vmem>>, %arg3: memref<1x64xf32, #tpu.memory_space<vmem>>, %arg4: memref<128x64xbf16, #tpu.memory_space<vmem>>, %arg5: memref<128x64xbf16, #tpu.memory_space<vmem>>) attributes {dimension_semantics = [#tpu.dimension_semantics<parallel>], iteration_bounds = array<i64: 1>, scalar_prefetch = 0 : i64, scratch_operands = 0 : i64, tpu.core_type = #tpu.core_type<tc>, window_params = [{transform_indices = @transform_0, window_bounds = array<i64: 128, 3>}, {pipeline_mode = #tpu.pipeline_mode<synchronous>, transform_indices = @transform_1, window_bounds = array<i64: 3, 64>}, {pipeline_mode = #tpu.pipeline_mode<synchronous>, transform_indices = @transform_2, window_bounds = array<i64: 1, 64>}, {transform_indices = @transform_3, window_bounds = array<i64: 128, 64>}, {transform_indices = @transform_4, window_bounds = array<i64: 128, 64>}]} {
    %c0 = arith.constant 0 : index
    %c0_0 = arith.constant 0 : index
    %0 = vector.load %arg1[%c0, %c0_0] : memref<128x3xf32, #tpu.memory_space<vmem>>, vector<128x3xf32>
    %c0_1 = arith.constant 0 : index
    %c0_2 = arith.constant 0 : index
    %1 = vector.load %arg2[%c0_1, %c0_2] : memref<3x64xf32, #tpu.memory_space<vmem>>, vector<3x64xf32>
    %cst = arith.constant dense<0.000000e+00> : vector<128x64xf32>
    %2 = tpu.matmul %0, %1, %cst {dimension_numbers = #tpu.dot_dimension_numbers<[1], [0], [0], [1], [0, 0, 1, 1], [], []>} : vector<128x3xf32>, vector<3x64xf32>, vector<128x64xf32> -> vector<128x64xf32>
    %3 = arith.truncf %2 : vector<128x64xf32> to vector<128x64xbf16>
    %c0_3 = arith.constant 0 : index
    %c0_4 = arith.constant 0 : index
    %4 = vector.load %arg5[%c0_3, %c0_4] : memref<128x64xbf16, #tpu.memory_space<vmem>>, vector<128x64xbf16>
    tpu.vector_store %arg5[%c0_3, %c0_4], %3 {strides = array<i32>} : memref<128x64xbf16, #tpu.memory_space<vmem>>, vector<128x64xbf16>,
    %c0_5 = arith.constant 0 : index
    %c0_6 = arith.constant 0 : index
    %5 = vector.load %arg3[%c0_5, %c0_6] : memref<1x64xf32, #tpu.memory_space<vmem>>, vector<1x64xf32>
    %6 = vector.broadcast %5 : vector<1x64xf32> to vector<128x64xf32>
    %7 = arith.addf %2, %6 : vector<128x64xf32>
    %8 = arith.truncf %7 : vector<128x64xf32> to vector<128x64xbf16>
    %c0_7 = arith.constant 0 : index
    %c0_8 = arith.constant 0 : index
    %9 = vector.load %arg4[%c0_7, %c0_8] : memref<128x64xbf16, #tpu.memory_space<vmem>>, vector<128x64xbf16>
    tpu.vector_store %arg4[%c0_7, %c0_8], %8 {strides = array<i32>} : memref<128x64xbf16, #tpu.memory_space<vmem>>, vector<128x64xbf16>,
    return
  }
  func.func @transform_0(%arg0: i32) -> (i32, i32) {
    %c0_i32 = arith.constant 0 : i32
    %c0_i32_0 = arith.constant 0 : i32
    return %arg0, %c0_i32 : i32, i32
  }
  func.func @transform_1(%arg0: i32) -> (i32, i32) {
    %c0_i32 = arith.constant 0 : i32
    %c0_i32_0 = arith.constant 0 : i32
    %c0_i32_1 = arith.constant 0 : i32
    return %c0_i32, %c0_i32_0 : i32, i32
  }
  func.func @transform_2(%arg0: i32) -> (i32, i32) {
    %c0_i32 = arith.constant 0 : i32
    %c0_i32_0 = arith.constant 0 : i32
    %c0_i32_1 = arith.constant 0 : i32
    return %c0_i32, %c0_i32_0 : i32, i32
  }
  func.func @transform_3(%arg0: i32) -> (i32, i32) {
    %c0_i32 = arith.constant 0 : i32
    %c0_i32_0 = arith.constant 0 : i32
    return %arg0, %c0_i32 : i32, i32
  }
  func.func @transform_4(%arg0: i32) -> (i32, i32) {
    %c0_i32 = arith.constant 0 : i32
    %c0_i32_0 = arith.constant 0 : i32
    return %arg0, %c0_i32 : i32, i32
  }
}

</mosaic_0001>

<llo_original>
// kernel: tpu_custom_call.1
$region0: #{tpu_custom_call.1}
  #allocation0 [shape = 'u32[]', space=smem, size = 0x4, offset = 0x4, fixed_abs, tag = 'smem constant byte address 0x4 - core index']
  #allocation1 [shape = 'u32[144,128]{1,0:T(1,128)}', space=vmem, size = 0x12000, scoped, tag = 'internal scratch']
  %s0 = inlined_call_operand.vmem [shape: f32[128,3], index: 0, kind: input, shape index: {}]
  %s1 = inlined_call_operand.vmem [shape: f32[3,64], index: 1, kind: input, shape index: {}]
  %s2 = inlined_call_operand.vmem [shape: f32[1,64], index: 2, kind: input, shape index: {}]
  %s3 = inlined_call_operand.vmem [shape: bf16[128,64], index: 3, kind: output, shape index: {0}]
  %s4 = inlined_call_operand.vmem [shape: bf16[128,64], index: 4, kind: output, shape index: {1}]
  %5 = xla_tuple %s3, %s4
  %s6 = sld [smem:[#allocation0]]
  $region30: #{tpu_custom_call.1} parent=0
    _
  %s8 = ssub.s32 1, %s6
  %s9 = scalar_select 0, %s8, %s6
  // Predicated region
  $region2: #{tpu_custom_call.1} parent=0 // pred_check
    _
  $region3: #{tpu_custom_call.1} parent=0 // pred_check_branch
    %11 = sbr.rel (0) target = $region5
  $region4: #{tpu_custom_call.1} parent=0 // pred_region
    _
  $region5: #{tpu_custom_call.1} parent=0 // pred_fallthru
    _
  // Predicated region
  $region6: #{tpu_custom_call.1} parent=0 // pred_check
    _
  $region7: #{tpu_custom_call.1} parent=0 // pred_check_branch
    %13 = sbr.rel (0) target = $region9
  $region8: #{tpu_custom_call.1} parent=0 // pred_region
    _
  $region9: #{tpu_custom_call.1} parent=0 // pred_fallthru
    _
  // Predicated region
  $region10: #{tpu_custom_call.1} parent=0 // pred_check
    _
  $region11: #{tpu_custom_call.1} parent=0 // pred_check_branch
    %15 = sbr.rel (0) target = $region13
  $region12: #{tpu_custom_call.1} parent=0 // pred_region
    _
  $region13: #{tpu_custom_call.1} parent=0 // pred_fallthru
    _
  %v16 = vld [vmem:[%s0] sm:$0xff]
  %v17 = vld [vmem:[%s0 + $0x8] sm:$0xff]
  %v18 = vld [vmem:[%s0 + $0x10] sm:$0xff]
  %v19 = vld [vmem:[%s0 + $0x18] sm:$0xff]
  %v20 = vld [vmem:[%s0 + $0x20] sm:$0xff]
  %v21 = vld [vmem:[%s0 + $0x28] sm:$0xff]
  %v22 = vld [vmem:[%s0 + $0x30] sm:$0xff]
  %v23 = vld [vmem:[%s0 + $0x38] sm:$0xff]
  %v24 = vld [vmem:[%s0 + $0x40] sm:$0xff]
  %v25 = vld [vmem:[%s0 + $0x48] sm:$0xff]
  %v26 = vld [vmem:[%s0 + $0x50] sm:$0xff]
  %v27 = vld [vmem:[%s0 + $0x58] sm:$0xff]
  %v28 = vld [vmem:[%s0 + $0x60] sm:$0xff]
  %v29 = vld [vmem:[%s0 + $0x68] sm:$0xff]
  %v30 = vld [vmem:[%s0 + $0x70] sm:$0xff]
  %v31 = vld [vmem:[%s0 + $0x78] sm:$0xff]
  %v32 = vld [vmem:[%s1] sm:$0x7]
  %vm33 = vcmask 23552
  %v35 = vsel %vm33, %v16, 0
  %v38 = vsel %vm33, %v17, 0
  %v41 = vsel %vm33, %v18, 0
  %v44 = vsel %vm33, %v19, 0
  %v47 = vsel %vm33, %v20, 0
  %v50 = vsel %vm33, %v21, 0
  %v53 = vsel %vm33, %v22, 0
  %v56 = vsel %vm33, %v23, 0
  %v59 = vsel %vm33, %v24, 0
  %v62 = vsel %vm33, %v25, 0
  %v65 = vsel %vm33, %v26, 0
  %v68 = vsel %vm33, %v27, 0
  %v71 = vsel %vm33, %v28, 0
  %v74 = vsel %vm33, %v29, 0
  %v77 = vsel %vm33, %v30, 0
  %v80 = vsel %vm33, %v31, 0
  %vm82 = vcmask 1042432
  %v84 = vsel %vm82, %v32, 0
  %86 = vmatprep.subr.mxu0 0.0
  %87 = vmatpush1.msra.mxu0 0.0
  %88 = vmatprep.subr.mxu0 0.0
  %89 = vmatpush1.msra.mxu0 0.0
  %90 = vmatprep.subr.mxu0 0.0
  %91 = vmatpush1.msra.mxu0 0.0
  %92 = vmatprep.subr.mxu0 0.0
  %93 = vmatpush1.msra.mxu0 0.0
  %94 = vmatprep.subr.mxu0 0.0
  %95 = vmatpush1.msra.mxu0 0.0
  %96 = vmatprep.subr.mxu0 0.0
  %97 = vmatpush1.msra.mxu0 0.0
  %98 = vmatprep.subr.mxu0 0.0
  %99 = vmatpush1.msra.mxu0 0.0
  %100 = vmatprep.subr.mxu0 0.0
  %101 = vmatpush1.msra.mxu0 0.0
  %102 = vmatprep.subr.mxu0 0.0
  %103 = vmatpush1.msra.mxu0 0.0
  %104 = vmatprep.subr.mxu0 0.0
  %105 = vmatpush1.msra.mxu0 0.0
  %106 = vmatprep.subr.mxu0 0.0
  %107 = vmatpush1.msra.mxu0 0.0
  %108 = vmatprep.subr.mxu0 0.0
  %109 = vmatpush1.msra.mxu0 0.0
  %110 = vmatprep.subr.mxu0 0.0
  %111 = vmatpush1.msra.mxu0 0.0
  %112 = vmatprep.subr.mxu0 0.0
  %113 = vmatpush1.msra.mxu0 0.0
  %114 = vmatprep.subr.mxu0 0.0
  %115 = vmatpush1.msra.mxu0 0.0
  %116 = vmatprep.subr.mxu0 0.0
  %117 = vmatpush1.msra.mxu0 %v84
  %118 = vmatprep.subr.mxu0 0.0
  %119 = vmatpush2.msra.mxu0 0.0
  %120 = vmatprep.subr.mxu0 0.0
  %121 = vmatpush2.msra.mxu0 0.0
  %122 = vmatprep.subr.mxu0 0.0
  %123 = vmatpush2.msra.mxu0 0.0
  %124 = vmatprep.subr.mxu0 0.0
  %125 = vmatpush2.msra.mxu0 0.0
  %126 = vmatprep.subr.mxu0 0.0
  %127 = vmatpush2.msra.mxu0 0.0
  %128 = vmatprep.subr.mxu0 0.0
  %129 = vmatpush2.msra.mxu0 0.0
  %130 = vmatprep.subr.mxu0 0.0
  %131 = vmatpush2.msra.mxu0 0.0
  %132 = vmatprep.subr.mxu0 0.0
  %133 = vmatpush2.msra.mxu0 0.0
  %134 = vmatprep.subr.mxu0 0.0
  %135 = vmatpush2.msra.mxu0 0.0
  %136 = vmatprep.subr.mxu0 0.0
  %137 = vmatpush2.msra.mxu0 0.0
  %138 = vmatprep.subr.mxu0 0.0
  %139 = vmatpush2.msra.mxu0 0.0
  %140 = vmatprep.subr.mxu0 0.0
  %141 = vmatpush2.msra.mxu0 0.0
  %142 = vmatprep.subr.mxu0 0.0
  %143 = vmatpush2.msra.mxu0 0.0
  %144 = vmatprep.subr.mxu0 0.0
  %145 = vmatpush2.msra.mxu0 0.0
  %146 = vmatprep.subr.mxu0 0.0
  %147 = vmatpush2.msra.mxu0 0.0
  %148 = vmatprep.subr.mxu0 0.0
  %149 = vmatpush2.msra.mxu0 0.0
  %150 = vmatprep.mubr.f32.mxu0 0.0
  %151 = vmatmul.mubr.f32.gmra.mxu0 %v35
  %v152 = vpop.f32.mrf.mxu0
  %v153 = vadd.f32 0.0, %v152
  %v154 = vpop.f32.mrf.mxu0
  %155 = vmatprep.mubr.f32.mxu0 0.0
  %156 = vmatmul.mubr.f32.gmra.mxu0 %v38
  %v157 = vpop.f32.mrf.mxu0
  %v158 = vadd.f32 0.0, %v157
  %v159 = vpop.f32.mrf.mxu0
  %160 = vmatprep.mubr.f32.mxu0 0.0
  %161 = vmatmul.mubr.f32.gmra.mxu0 %v41
  %v162 = vpop.f32.mrf.mxu0
  %v163 = vadd.f32 0.0, %v162
  %v164 = vpop.f32.mrf.mxu0
  %165 = vmatprep.mubr.f32.mxu0 0.0
  %166 = vmatmul.mubr.f32.gmra.mxu0 %v44
  %v167 = vpop.f32.mrf.mxu0
  %v168 = vadd.f32 0.0, %v167
  %v169 = vpop.f32.mrf.mxu0
  %170 = vmatprep.mubr.f32.mxu0 0.0
  %171 = vmatmul.mubr.f32.gmra.mxu0 %v47
  %v172 = vpop.f32.mrf.mxu0
  %v173 = vadd.f32 0.0, %v172
  %v174 = vpop.f32.mrf.mxu0
  %175 = vmatprep.mubr.f32.mxu0 0.0
  %176 = vmatmul.mubr.f32.gmra.mxu0 %v50
  %v177 = vpop.f32.mrf.mxu0
  %v178 = vadd.f32 0.0, %v177
  %v179 = vpop.f32.mrf.mxu0
  %180 = vmatprep.mubr.f32.mxu0 0.0
  %181 = vmatmul.mubr.f32.gmra.mxu0 %v53
  %v182 = vpop.f32.mrf.mxu0
  %v183 = vadd.f32 0.0, %v182
  %v184 = vpop.f32.mrf.mxu0
  %185 = vmatprep.mubr.f32.mxu0 0.0
  %186 = vmatmul.mubr.f32.gmra.mxu0 %v56
  %v187 = vpop.f32.mrf.mxu0
  %v188 = vadd.f32 0.0, %v187
  %v189 = vpop.f32.mrf.mxu0
  %190 = vmatprep.mubr.f32.mxu0 0.0
  %191 = vmatmul.mubr.f32.gmra.mxu0 %v59
  %v192 = vpop.f32.mrf.mxu0
  %v193 = vadd.f32 0.0, %v192
  %v194 = vpop.f32.mrf.mxu0
  %195 = vmatprep.mubr.f32.mxu0 0.0
  %196 = vmatmul.mubr.f32.gmra.mxu0 %v62
  %v197 = vpop.f32.mrf.mxu0
  %v198 = vadd.f32 0.0, %v197
  %v199 = vpop.f32.mrf.mxu0
  %200 = vmatprep.mubr.f32.mxu0 0.0
  %201 = vmatmul.mubr.f32.gmra.mxu0 %v65
  %v202 = vpop.f32.mrf.mxu0
  %v203 = vadd.f32 0.0, %v202
  %v204 = vpop.f32.mrf.mxu0
  %205 = vmatprep.mubr.f32.mxu0 0.0
  %206 = vmatmul.mubr.f32.gmra.mxu0 %v68
  %v207 = vpop.f32.mrf.mxu0
  %v208 = vadd.f32 0.0, %v207
  %v209 = vpop.f32.mrf.mxu0
  %210 = vmatprep.mubr.f32.mxu0 0.0
  %211 = vmatmul.mubr.f32.gmra.mxu0 %v71
  %v212 = vpop.f32.mrf.mxu0
  %v213 = vadd.f32 0.0, %v212
  %v214 = vpop.f32.mrf.mxu0
  %215 = vmatprep.mubr.f32.mxu0 0.0
  %216 = vmatmul.mubr.f32.gmra.mxu0 %v74
  %v217 = vpop.f32.mrf.mxu0
  %v218 = vadd.f32 0.0, %v217
  %v219 = vpop.f32.mrf.mxu0
  %220 = vmatprep.mubr.f32.mxu0 0.0
  %221 = vmatmul.mubr.f32.gmra.mxu0 %v77
  %v222 = vpop.f32.mrf.mxu0
  %v223 = vadd.f32 0.0, %v222
  %v224 = vpop.f32.mrf.mxu0
  %225 = vmatprep.mubr.f32.mxu0 0.0
  %226 = vmatmul.mubr.f32.gmra.mxu0 %v80
  %v227 = vpop.f32.mrf.mxu0
  %v228 = vadd.f32 0.0, %v227
  %v229 = vpop.f32.mrf.mxu0
  %230 = vdwg.mxu0
  %v231 = vpack.c.bf16 %v158, %v153
  %v232 = vpack.c.bf16 %v168, %v163
  %v233 = vpack.c.bf16 %v178, %v173
  %v234 = vpack.c.bf16 %v188, %v183
  %v235 = vpack.c.bf16 %v198, %v193
  %v236 = vpack.c.bf16 %v208, %v203
  %v237 = vpack.c.bf16 %v218, %v213
  %v238 = vpack.c.bf16 %v228, %v223
  %v247 = vunpack.c.l.b16 %v231
  %v248 = vunpack.c.h.b16 %v231
  %v249 = vunpack.c.l.b16 %v232
  %v250 = vunpack.c.h.b16 %v232
  %v251 = vunpack.c.l.b16 %v233
  %v252 = vunpack.c.h.b16 %v233
  %v253 = vunpack.c.l.b16 %v234
  %v254 = vunpack.c.h.b16 %v234
  %v255 = vunpack.c.l.b16 %v235
  %v256 = vunpack.c.h.b16 %v235
  %v257 = vunpack.c.l.b16 %v236
  %v258 = vunpack.c.h.b16 %v236
  %v259 = vunpack.c.l.b16 %v237
  %v260 = vunpack.c.h.b16 %v237
  %v261 = vunpack.c.l.b16 %v238
  %v262 = vunpack.c.h.b16 %v238
  %v263 = vpack.c.b16 %v247, %v247
  %v264 = vpack.c.b16 %v248, %v248
  %v265 = vpack.c.b16 %v249, %v249
  %v266 = vpack.c.b16 %v250, %v250
  %v267 = vpack.c.b16 %v251, %v251
  %v268 = vpack.c.b16 %v252, %v252
  %v269 = vpack.c.b16 %v253, %v253
  %v270 = vpack.c.b16 %v254, %v254
  %v271 = vpack.c.b16 %v255, %v255
  %v272 = vpack.c.b16 %v256, %v256
  %v273 = vpack.c.b16 %v257, %v257
  %v274 = vpack.c.b16 %v258, %v258
  %v275 = vpack.c.b16 %v259, %v259
  %v276 = vpack.c.b16 %v260, %v260
  %v277 = vpack.c.b16 %v261, %v261
  %v278 = vpack.c.b16 %v262, %v262
  %vm295 = vcmask 519168
  %296 = vst.msk [vmem:[%s4] sm:$0xf] %vm295, %v263
  %297 = vst.msk [vmem:[%s4 + $0x4] sm:$0xf] %vm295, %v264
  %298 = vst.msk [vmem:[%s4 + $0x8] sm:$0xf] %vm295, %v265
  %299 = vst.msk [vmem:[%s4 + $0xc] sm:$0xf] %vm295, %v266
  %300 = vst.msk [vmem:[%s4 + $0x10] sm:$0xf] %vm295, %v267
  %301 = vst.msk [vmem:[%s4 + $0x14] sm:$0xf] %vm295, %v268
  %302 = vst.msk [vmem:[%s4 + $0x18] sm:$0xf] %vm295, %v269
  %303 = vst.msk [vmem:[%s4 + $0x1c] sm:$0xf] %vm295, %v270
  %304 = vst.msk [vmem:[%s4 + $0x20] sm:$0xf] %vm295, %v271
  %305 = vst.msk [vmem:[%s4 + $0x24] sm:$0xf] %vm295, %v272
  %306 = vst.msk [vmem:[%s4 + $0x28] sm:$0xf] %vm295, %v273
  %307 = vst.msk [vmem:[%s4 + $0x2c] sm:$0xf] %vm295, %v274
  %308 = vst.msk [vmem:[%s4 + $0x30] sm:$0xf] %vm295, %v275
  %309 = vst.msk [vmem:[%s4 + $0x34] sm:$0xf] %vm295, %v276
  %310 = vst.msk [vmem:[%s4 + $0x38] sm:$0xf] %vm295, %v277
  %311 = vst.msk [vmem:[%s4 + $0x3c] sm:$0xf] %vm295, %v278
  %v312 = vld [vmem:[%s2] sm:$0x1]
  %v314 = vlaneseq
  %v315 = vshrl.u32 %v314, 7
  %v316 = vsub.s32 0, %v315
  %v317 = vrot.slane %v312, %v316
  %v319 = vadd.f32 %v153, %v317
  %v320 = vadd.f32 %v158, %v317
  %v321 = vadd.f32 %v163, %v317
  %v322 = vadd.f32 %v168, %v317
  %v323 = vadd.f32 %v173, %v317
  %v324 = vadd.f32 %v178, %v317
  %v325 = vadd.f32 %v183, %v317
  %v326 = vadd.f32 %v188, %v317
  %v327 = vadd.f32 %v193, %v317
  %v328 = vadd.f32 %v198, %v317
  %v329 = vadd.f32 %v203, %v317
  %v330 = vadd.f32 %v208, %v317
  %v331 = vadd.f32 %v213, %v317
  %v332 = vadd.f32 %v218, %v317
  %v333 = vadd.f32 %v223, %v317
  %v334 = vadd.f32 %v228, %v317
  %v335 = vpack.c.bf16 %v320, %v319
  %v336 = vpack.c.bf16 %v322, %v321
  %v337 = vpack.c.bf16 %v324, %v323
  %v338 = vpack.c.bf16 %v326, %v325
  %v339 = vpack.c.bf16 %v328, %v327
  %v340 = vpack.c.bf16 %v330, %v329
  %v341 = vpack.c.bf16 %v332, %v331
  %v342 = vpack.c.bf16 %v334, %v333
  %v351 = vunpack.c.l.b16 %v335
  %v352 = vunpack.c.h.b16 %v335
  %v353 = vunpack.c.l.b16 %v336
  %v354 = vunpack.c.h.b16 %v336
  %v355 = vunpack.c.l.b16 %v337
  %v356 = vunpack.c.h.b16 %v337
  %v357 = vunpack.c.l.b16 %v338
  %v358 = vunpack.c.h.b16 %v338
  %v359 = vunpack.c.l.b16 %v339
  %v360 = vunpack.c.h.b16 %v339
  %v361 = vunpack.c.l.b16 %v340
  %v362 = vunpack.c.h.b16 %v340
  %v363 = vunpack.c.l.b16 %v341
  %v364 = vunpack.c.h.b16 %v341
  %v365 = vunpack.c.l.b16 %v342
  %v366 = vunpack.c.h.b16 %v342
  %v367 = vpack.c.b16 %v351, %v351
  %v368 = vpack.c.b16 %v352, %v352
  %v369 = vpack.c.b16 %v353, %v353
  %v370 = vpack.c.b16 %v354, %v354
  %v371 = vpack.c.b16 %v355, %v355
  %v372 = vpack.c.b16 %v356, %v356
  %v373 = vpack.c.b16 %v357, %v357
  %v374 = vpack.c.b16 %v358, %v358
  %v375 = vpack.c.b16 %v359, %v359
  %v376 = vpack.c.b16 %v360, %v360
  %v377 = vpack.c.b16 %v361, %v361
  %v378 = vpack.c.b16 %v362, %v362
  %v379 = vpack.c.b16 %v363, %v363
  %v380 = vpack.c.b16 %v364, %v364
  %v381 = vpack.c.b16 %v365, %v365
  %v382 = vpack.c.b16 %v366, %v366
  %399 = vst.msk [vmem:[%s3] sm:$0xf] %vm295, %v367
  %400 = vst.msk [vmem:[%s3 + $0x4] sm:$0xf] %vm295, %v368
  %401 = vst.msk [vmem:[%s3 + $0x8] sm:$0xf] %vm295, %v369
  %402 = vst.msk [vmem:[%s3 + $0xc] sm:$0xf] %vm295, %v370
  %403 = vst.msk [vmem:[%s3 + $0x10] sm:$0xf] %vm295, %v371
  %404 = vst.msk [vmem:[%s3 + $0x14] sm:$0xf] %vm295, %v372
  %405 = vst.msk [vmem:[%s3 + $0x18] sm:$0xf] %vm295, %v373
  %406 = vst.msk [vmem:[%s3 + $0x1c] sm:$0xf] %vm295, %v374
  %407 = vst.msk [vmem:[%s3 + $0x20] sm:$0xf] %vm295, %v375
  %408 = vst.msk [vmem:[%s3 + $0x24] sm:$0xf] %vm295, %v376
  %409 = vst.msk [vmem:[%s3 + $0x28] sm:$0xf] %vm295, %v377
  %410 = vst.msk [vmem:[%s3 + $0x2c] sm:$0xf] %vm295, %v378
  %411 = vst.msk [vmem:[%s3 + $0x30] sm:$0xf] %vm295, %v379
  %412 = vst.msk [vmem:[%s3 + $0x34] sm:$0xf] %vm295, %v380
  %413 = vst.msk [vmem:[%s3 + $0x38] sm:$0xf] %vm295, %v381
  %414 = vst.msk [vmem:[%s3 + $0x3c] sm:$0xf] %vm295, %v382
  // Predicated region
  $region14: #{tpu_custom_call.1} parent=0 // pred_check
    _
  $region15: #{tpu_custom_call.1} parent=0 // pred_check_branch
    %416 = sbr.rel (0) target = $region17
  $region16: #{tpu_custom_call.1} parent=0 // pred_region
    _
  $region17: #{tpu_custom_call.1} parent=0 // pred_fallthru
    _
  // Predicated region
  $region18: #{tpu_custom_call.1} parent=0 // pred_check
    _
  $region19: #{tpu_custom_call.1} parent=0 // pred_check_branch
    %418 = sbr.rel (0) target = $region21
  $region20: #{tpu_custom_call.1} parent=0 // pred_region
    _
  $region21: #{tpu_custom_call.1} parent=0 // pred_fallthru
    _
  // Predicated region
  $region22: #{tpu_custom_call.1} parent=0 // pred_check
    _
  $region23: #{tpu_custom_call.1} parent=0 // pred_check_branch
    %420 = sbr.rel (0) target = $region25
  $region24: #{tpu_custom_call.1} parent=0 // pred_region
    _
  $region25: #{tpu_custom_call.1} parent=0 // pred_fallthru
    _
  // Predicated region
  $region26: #{tpu_custom_call.1} parent=0 // pred_check
    _
  $region27: #{tpu_custom_call.1} parent=0 // pred_check_branch
    %422 = sbr.rel (0) target = $region29
  $region28: #{tpu_custom_call.1} parent=0 // pred_region
    _
  $region29: #{tpu_custom_call.1} parent=0 // pred_fallthru
    _

</llo_original>
